<compile_context>
chip_gen: v7x
topology: tpu7x:2x2x1
jax: 0.10.0
libtpu: 0.0.40
codegen_flags: <defaults>
</compile_context>

<pallas_src>
import math

import jax
import jax.numpy as jnp
from jax.experimental import pallas as pl
from jax.experimental.pallas import tpu as pltpu

COORD_PAD = 8   # xyz padded 3 -> 8 rows for the (8, TN) KNN tiles (zeros are no-ops).
SUBLANES = 8    # FPS packs the point axis over all 8 sublanes.


# ---------------------------------------------------------------------------
# Kernel 1: farthest point sampling (serial loop, sublane-packed, index output)
# ---------------------------------------------------------------------------
def fps_pallas(xp, init_idx, num_groups, n_valid):
    """xp: (3, 8, L) f32 packed coordinate planes (point n lives at (n // L, n % L),
    entries for n >= n_valid are 0).  init_idx: (1,) i32.
    Returns (1, Gpad) i32 whose first num_groups lanes are the FPS point indices."""
    _, spad, lpad = xp.shape
    npad = spad * lpad
    gpad = 128 * pl.cdiv(num_groups, 128)

    def kernel(init_ref, xp_ref, idx_ref, dist_ref):
        sub = jax.lax.broadcasted_iota(jnp.int32, (spad, lpad), 0)
        lane = jax.lax.broadcasted_iota(jnp.int32, (spad, lpad), 1)
        pidx = sub * lpad + lane                                    # global point index (8, L)
        g_iota = jax.lax.broadcasted_iota(jnp.int32, (1, gpad), 1)
        # Padded points start at -1.0 so they can never win the argmax
        # (real squared distances are >= 0).  Real points start at 1e10 (torch).
        dist_ref[...] = jnp.where(pidx < n_valid, 1e10, -1.0).astype(jnp.float32)
        xr = xp_ref[0]
        yr = xp_ref[1]
        zr = xp_ref[2]

        def body(i, carry):
            farthest, idx_row = carry
            idx_row = jnp.where(g_iota == i, farthest, idx_row)
            # One-hot extraction of the chosen point, restricted to the 3 real
            # coordinate planes (pure vector ops; no scalar gather needed).
            onehot = pidx == farthest
            cx = jnp.sum(jnp.where(onehot, xr, 0.0))
            cy = jnp.sum(jnp.where(onehot, yr, 0.0))
            cz = jnp.sum(jnp.where(onehot, zr, 0.0))
            dx = xr - cx
            dy = yr - cy
            dz = zr - cz
            d = dx * dx + dy * dy + dz * dz                         # exact (x - c)^2, (8, L)
            nd = jnp.minimum(dist_ref[...], d)
            dist_ref[...] = nd
            # Exact argmax with first-occurrence (smallest index) tie-break, like torch.max.
            mx = jnp.max(nd)
            nxt = jnp.min(jnp.where(nd == mx, pidx, npad))
            return nxt, idx_row

        _, idx_row = jax.lax.fori_loop(
            0, num_groups, body,
            (init_ref[0], jnp.zeros((1, gpad), jnp.int32)))
        idx_ref[...] = idx_row

    # TODO(synk): for point clouds too large for VMEM (esp. v7x's 64 MiB), stream
    # xp over N-tiles with a manual double buffer inside the FPS loop.
    need = 4 * (3 * npad + npad + gpad)
    vmem_limit = int(min(max(2 * need + (2 << 20), 4 << 20), 100 * (1 << 20)))
    return pl.pallas_call(
        kernel,
        out_shape=jax.ShapeDtypeStruct((1, gpad), jnp.int32),
        in_specs=[pl.BlockSpec(memory_space=pltpu.MemorySpace.SMEM),
                  pl.BlockSpec(memory_space=pltpu.MemorySpace.VMEM)],
        out_specs=pl.BlockSpec(memory_space=pltpu.MemorySpace.VMEM),
        scratch_shapes=[pltpu.VMEM((spad, lpad), jnp.float32)],
        compiler_params=pltpu.CompilerParams(vmem_limit_bytes=vmem_limit),
    )(init_idx, xp)


# ---------------------------------------------------------------------------
# Kernel 2: N-tiled pairwise distances + nearest-center argmin + fused top-k
# ---------------------------------------------------------------------------
def knn_topk_pallas(centers_m2, csq, xt_pad, xsq, n_valid, group_size, tile_n):
    """centers_m2: (G, 8) f32 = -2 * centers (pre-scaled, coord-padded);
    csq: (G, 1) f32 = |c|^2 (hoisted); xt_pad: (8, Npad) f32 coordinate-major
    points; xsq: (1, Npad) f32 = |x|^2 (hoisted).  Returns
    (nearest_center_idx (1, Npad) i32, top_idx (G, MP) i32 whose first
    group_size lanes per row are the KNN indices)."""
    g, kdim = centers_m2.shape
    cpad, npad = xt_pad.shape
    assert npad % tile_n == 0
    num_tiles = npad // tile_n
    mp = 128 * pl.cdiv(group_size, 128)          # lane-padded accumulator width
    INF = float("inf")
    BIG = 2 ** 30

    def kernel(c_ref, csq_ref, xt_ref, xsq_ref, nci_ref, topi_ref, acc_v, acc_i):
        t = pl.program_id(0)

        @pl.when(t == 0)
        def _init():
            acc_v[...] = jnp.full((g, mp), INF, jnp.float32)
            acc_i[...] = jnp.zeros((g, mp), jnp.int32)

        # d = -2 c.x + |c|^2 + |x|^2 (the -2 scale and |x|^2 are hoisted to the
        # wrapper; the tiny K=8 matmul stays on the otherwise-idle MXU).
        d = jnp.dot(c_ref[...], xt_ref[...], preferred_element_type=jnp.float32)
        d = d + csq_ref[...]                                     # (G, 1) broadcast
        d = d + xsq_ref[...]                                     # (1, TN) broadcast

        # Nearest center per point (argmin over G, first occurrence).
        g_iota = jax.lax.broadcasted_iota(jnp.int32, (g, tile_n), 0)
        dmin = jnp.min(d, axis=0, keepdims=True)
        nci_ref[...] = jnp.min(jnp.where(d == dmin, g_iota, g),
                               axis=0, keepdims=True)

        # Global point index per lane; padded columns -> +inf (never selected).
        pt_idx = t * tile_n + jax.lax.broadcasted_iota(jnp.int32, (g, tile_n), 1)
        d = jnp.where(pt_idx < n_valid, d, INF)

        # Fused top-`group_size`: register-resident window = carried best (G, MP)
        # ++ fresh tile (G, TN) (both lane multiples of 128, so the concat is
        # relayout-free and nothing round-trips through scratch).  2 cross-lane
        # reduces per selected neighbor; ties break towards the smaller point
        # index; point indices are unique so exactly one lane is invalidated.
        wv = jnp.concatenate([acc_v[...], d], axis=1)
        wi = jnp.concatenate([acc_i[...], pt_idx], axis=1)
        lane_m = jax.lax.broadcasted_iota(jnp.int32, (g, mp), 1)
        new_v = jnp.full((g, mp), INF, jnp.float32)
        new_i = jnp.zeros((g, mp), jnp.int32)
        for m in range(group_size):                               # small static unrolled loop
            mv = jnp.min(wv, axis=1, keepdims=True)               # (G, 1)
            iv = jnp.min(jnp.where(wv == mv, wi, BIG),
                         axis=1, keepdims=True)                   # smallest index among ties
            new_v = jnp.where(lane_m == m, mv, new_v)
            new_i = jnp.where(lane_m == m, iv, new_i)
            wv = jnp.where((wv == mv) & (wi == iv), INF, wv)
        acc_v[...] = new_v
        acc_i[...] = new_i

        # Only the last tile's selection matters for the output block.
        @pl.when(t == num_tiles - 1)
        def _fin():
            topi_ref[...] = new_i

    # TODO(synk): for num_groups >~ 128 add a second ("parallel") grid axis over
    # group blocks (keeps the selection live set inside the vreg file and feeds
    # v7x's second TensorCore); the nearest-center argmin then needs its own pass.
    return pl.pallas_call(
        kernel,
        out_shape=(jax.ShapeDtypeStruct((1, npad), jnp.int32),
                   jax.ShapeDtypeStruct((g, mp), jnp.int32)),
        grid=(num_tiles,),
        in_specs=[pl.BlockSpec((g, kdim), lambda t: (0, 0)),       # -2 * centers
                  pl.BlockSpec((g, 1), lambda t: (0, 0)),          # |c|^2 (hoisted)
                  pl.BlockSpec((cpad, tile_n), lambda t: (0, t)),  # x tile
                  pl.BlockSpec((1, tile_n), lambda t: (0, t))],    # |x|^2 tile (hoisted)
        out_specs=(pl.BlockSpec((1, tile_n), lambda t: (0, t)),    # nci tile
                   pl.BlockSpec((g, mp), lambda t: (0, 0))),       # top-k indices
        scratch_shapes=[pltpu.VMEM((g, mp), jnp.float32),
                        pltpu.VMEM((g, mp), jnp.int32)],
        compiler_params=pltpu.CompilerParams(
            # the top-k accumulator carries across N tiles -> sequential axis
            dimension_semantics=("arbitrary",)),
    )(centers_m2, csq, xt_pad, xsq)


# ---------------------------------------------------------------------------
# Grouper.forward
# ---------------------------------------------------------------------------
def grouper_forward_with_aux(x, features, num_groups, group_size, key, tile_n=512):
    """x: (1, N, 3), features: (1, N, F).
    Returns (neighbors (1,G,M,F), nearest_center_idx (1,N) i32, centers (G,3),
    neighbor indices (G,M) i32)."""
    b, n, c = x.shape
    assert b == 1, "Grouper semantics (like the torch reference) assume B == 1"
    assert c == 3 and group_size <= n
    tile_n = max(128, (tile_n // 128) * 128)
    # Npad must be a multiple of tile_n (KNN grid) and of 8*128 (lane-dense FPS pack).
    unit = tile_n * 1024 // math.gcd(tile_n, 1024)
    npad = unit * ((n + unit - 1) // unit)
    lpad = npad // SUBLANES

    xt3 = jnp.zeros((3, npad), jnp.float32).at[:, :n].set(x[0].astype(jnp.float32).T)
    xt8 = jnp.zeros((COORD_PAD, npad), jnp.float32).at[:3].set(xt3)   # (8, Npad) for KNN
    xp = xt3.reshape(3, SUBLANES, lpad)                               # (3, 8, L) for FPS
    xsq = jnp.sum(xt3 * xt3, axis=0, keepdims=True)                   # (1, Npad) hoisted |x|^2

    # torch uses torch.randint for the initial farthest point; deterministic here.
    init_idx = jax.random.randint(key, (1,), 0, n, dtype=jnp.int32)

    fps_idx = fps_pallas(xp, init_idx, num_groups, n)[0, :num_groups]  # (G,) i32
    centers = x[0].astype(jnp.float32)[fps_idx]                        # (G, 3)
    centers_m2 = jnp.zeros((num_groups, COORD_PAD), jnp.float32)
    centers_m2 = centers_m2.at[:, :3].set(-2.0 * centers)              # hoisted -2 scale
    csq = jnp.sum(centers * centers, axis=1, keepdims=True)            # (G, 1) hoisted |c|^2

    nci_pad, top_idx = knn_topk_pallas(centers_m2, csq, xt8, xsq, n, group_size, tile_n)
    nbr_idx = top_idx[:, :group_size]                                  # (G, M)

    # TODO(synk): the data-dependent feature gather stays in plain JAX; doing it
    # in-kernel needs a PrefetchScalarGridSpec / manual-DMA gather over features.
    neighbors = features[0][nbr_idx][None]                             # (1, G, M, F)
    nearest_center_idx = nci_pad[:, :n]                                # (1, N)
    return neighbors, nearest_center_idx, centers, nbr_idx


def grouper_forward(x, features, num_groups, group_size, key, tile_n=512):
    neighbors, nci, _, _ = grouper_forward_with_aux(
        x, features, num_groups, group_size, key, tile_n)
    return neighbors, nci


# ---------------------------------------------------------------------------
# pure-JAX reference (mirrors the torch module) + demo
# ---------------------------------------------------------------------------
def _reference_fps_centers(x, num_groups, key):
    xyz = x[0].astype(jnp.float32)
    n = xyz.shape[0]
    farthest = jax.random.randint(key, (1,), 0, n, dtype=jnp.int32)[0]
    dist = jnp.full((n,), 1e10, jnp.float32)
    idxs = []
    for _ in range(num_groups):
        idxs.append(farthest)
        cen = xyz[farthest]
        dist = jnp.minimum(dist, jnp.sum((xyz - cen) ** 2, axis=-1))
        farthest = jnp.argmax(dist).astype(jnp.int32)
    return xyz[jnp.stack(idxs)]                                        # (G, 3)


if __name__ == "__main__":
    key = jax.random.PRNGKey(0)
    k_x, k_f, k_init = jax.random.split(key, 3)

    B, N, F = 1, 256, 32
    NUM_GROUPS, GROUP_SIZE = 16, 8
    TILE_N = 128   # Npad = 1024 -> 8 N-tiles: exercises the cross-tile top-k carry

    x = jax.random.normal(k_x, (B, N, 3), dtype=jnp.float32)
    features = jax.random.normal(k_f, (B, N, F), dtype=jnp.float32)

    neighbors, nci, centers, nbr_idx = grouper_forward_with_aux(
        x, features, NUM_GROUPS, GROUP_SIZE, k_init, tile_n=TILE_N)
    jax.block_until_ready((neighbors, nci, centers, nbr_idx))

    assert neighbors.shape == (1, NUM_GROUPS, GROUP_SIZE, F)
    assert nci.shape == (1, N) and nci.dtype == jnp.int32
    assert bool(jnp.all((nci >= 0) & (nci < NUM_GROUPS)))
    assert bool(jnp.all((nbr_idx >= 0) & (nbr_idx < N)))

    # FPS centers must match the reference FPS.
    ref_centers = _reference_fps_centers(x, NUM_GROUPS, k_init)
    assert bool(jnp.allclose(centers, ref_centers, atol=1e-6))

    # tolerant checks of the KNN kernel against reference distance math.
    xyz = x[0]
    dmat = (-2.0 * centers @ xyz.T
            + jnp.sum(centers ** 2, axis=-1, keepdims=True)
            + jnp.sum(xyz ** 2, axis=-1)[None, :])                  # (G, N)
    chosen = jnp.take_along_axis(dmat, nci, axis=0)                 # (1, N)
    assert bool(jnp.all(chosen <= jnp.min(dmat, axis=0, keepdims=True) + 1e-3))
    sel_d = jnp.take_along_axis(dmat, nbr_idx, axis=1)              # (G, M)
    kth = jnp.sort(dmat, axis=1)[:, GROUP_SIZE - 1:GROUP_SIZE]      # (G, 1)
    assert bool(jnp.all(sel_d <= kth + 1e-3))
    srt = jnp.sort(nbr_idx, axis=1)                                 # no duplicates
    assert bool(jnp.all(srt[:, 1:] > srt[:, :-1]))

    print("KERNEL_OK")
</pallas_src>

<mosaic_0001>
module attributes {stable_mosaic.version = 11 : i64} {
  func.func @kernel(%arg0: memref<1xi32, #tpu.memory_space<smem>>, %arg1: memref<3x8x128xf32, #tpu.memory_space<vmem>>, %arg2: memref<1x128xi32, #tpu.memory_space<vmem>>, %arg3: memref<8x128xf32, #tpu.memory_space<vmem>>) attributes {dimension_semantics = [], scalar_prefetch = 0 : i64, scratch_operands = 1 : i64, tpu.core_type = #tpu.core_type<tc>} {
    %0 = tpu.iota {dimensions = array<i32: 0>} : vector<8x128xi32>
    %1 = tpu.iota {dimensions = array<i32: 1>} : vector<8x128xi32>
    %c128_i32 = arith.constant 128 : i32
    %2 = vector.broadcast %c128_i32 : i32 to vector<8x128xi32>
    %3 = arith.muli %0, %2 : vector<8x128xi32>
    %4 = arith.addi %3, %1 : vector<8x128xi32>
    %5 = tpu.iota {dimensions = array<i32: 1>} : vector<1x128xi32>
    %c256_i32 = arith.constant 256 : i32
    %6 = vector.broadcast %c256_i32 : i32 to vector<8x128xi32>
    %7 = arith.cmpi slt, %4, %6 : vector<8x128xi32>
    %cst = arith.constant 1.000000e+10 : f32
    %cst_0 = arith.constant -1.000000e+00 : f32
    %8 = vector.broadcast %cst : f32 to vector<8x128xf32>
    %9 = vector.broadcast %cst_0 : f32 to vector<8x128xf32>
    %10 = arith.select %7, %8, %9 : vector<8x128xi1>, vector<8x128xf32>
    %c0 = arith.constant 0 : index
    %c0_1 = arith.constant 0 : index
    %11 = vector.load %arg3[%c0, %c0_1] : memref<8x128xf32, #tpu.memory_space<vmem>>, vector<8x128xf32>
    tpu.vector_store %arg3[%c0, %c0_1], %10 {strides = array<i32>} : memref<8x128xf32, #tpu.memory_space<vmem>>, vector<8x128xf32>,
    %c0_2 = arith.constant 0 : index
    %c0_3 = arith.constant 0 : index
    %c0_4 = arith.constant 0 : index
    %12 = vector.load %arg1[%c0_2, %c0_3, %c0_4] : memref<3x8x128xf32, #tpu.memory_space<vmem>>, vector<1x8x128xf32>
    %13 = vector.shape_cast %12 : vector<1x8x128xf32> to vector<8x128xf32>
    %c1 = arith.constant 1 : index
    %c0_5 = arith.constant 0 : index
    %c0_6 = arith.constant 0 : index
    %14 = vector.load %arg1[%c1, %c0_5, %c0_6] : memref<3x8x128xf32, #tpu.memory_space<vmem>>, vector<1x8x128xf32>
    %15 = vector.shape_cast %14 : vector<1x8x128xf32> to vector<8x128xf32>
    %c2 = arith.constant 2 : index
    %c0_7 = arith.constant 0 : index
    %c0_8 = arith.constant 0 : index
    %16 = vector.load %arg1[%c2, %c0_7, %c0_8] : memref<3x8x128xf32, #tpu.memory_space<vmem>>, vector<1x8x128xf32>
    %17 = vector.shape_cast %16 : vector<1x8x128xf32> to vector<8x128xf32>
    %c0_9 = arith.constant 0 : index
    %18 = memref.load %arg0[%c0_9] : memref<1xi32, #tpu.memory_space<smem>>
    %c0_i32 = arith.constant 0 : i32
    %19 = vector.broadcast %c0_i32 : i32 to vector<1x128xi32>
    %c0_i32_10 = arith.constant 0 : i32
    %c16_i32 = arith.constant 16 : i32
    %20 = arith.addi %c0_i32_10, %c16_i32 : i32
    %c1_i32 = arith.constant 1 : i32
    %21:2 = scf.for %arg4 = %c0_i32_10 to %20 step %c1_i32 iter_args(%arg5 = %18, %arg6 = %19) -> (i32, vector<1x128xi32>)  : i32 {
      %23 = vector.broadcast %arg4 : i32 to vector<1x128xi32>
      %24 = arith.cmpi eq, %5, %23 : vector<1x128xi32>
      %25 = vector.broadcast %arg5 : i32 to vector<1x128xi32>
      %26 = arith.select %24, %25, %arg6 : vector<1x128xi1>, vector<1x128xi32>
      %27 = vector.broadcast %arg5 : i32 to vector<8x128xi32>
      %28 = arith.cmpi eq, %4, %27 : vector<8x128xi32>
      %cst_14 = arith.constant 0.000000e+00 : f32
      %29 = vector.broadcast %cst_14 : f32 to vector<8x128xf32>
      %30 = arith.select %28, %13, %29 : vector<8x128xi1>, vector<8x128xf32>
      %31 = vector.shape_cast %30 : vector<8x128xf32> to vector<1x8x128xf32>
      %cst_15 = arith.constant dense<0.000000e+00> : vector<1xf32>
      %32 = vector.multi_reduction <add>, %31, %cst_15 [1, 2] : vector<1x8x128xf32> to vector<1xf32>
      %33 = vector.shape_cast %32 : vector<1xf32> to vector<1x1x1xf32>
      %34 = vector.extract %33[0, 0, 0] : f32 from vector<1x1x1xf32>
      %cst_16 = arith.constant 0.000000e+00 : f32
      %35 = vector.broadcast %cst_16 : f32 to vector<8x128xf32>
      %36 = arith.select %28, %15, %35 : vector<8x128xi1>, vector<8x128xf32>
      %37 = vector.shape_cast %36 : vector<8x128xf32> to vector<1x8x128xf32>
      %cst_17 = arith.constant dense<0.000000e+00> : vector<1xf32>
      %38 = vector.multi_reduction <add>, %37, %cst_17 [1, 2] : vector<1x8x128xf32> to vector<1xf32>
      %39 = vector.shape_cast %38 : vector<1xf32> to vector<1x1x1xf32>
      %40 = vector.extract %39[0, 0, 0] : f32 from vector<1x1x1xf32>
      %cst_18 = arith.constant 0.000000e+00 : f32
      %41 = vector.broadcast %cst_18 : f32 to vector<8x128xf32>
      %42 = arith.select %28, %17, %41 : vector<8x128xi1>, vector<8x128xf32>
      %43 = vector.shape_cast %42 : vector<8x128xf32> to vector<1x8x128xf32>
      %cst_19 = arith.constant dense<0.000000e+00> : vector<1xf32>
      %44 = vector.multi_reduction <add>, %43, %cst_19 [1, 2] : vector<1x8x128xf32> to vector<1xf32>
      %45 = vector.shape_cast %44 : vector<1xf32> to vector<1x1x1xf32>
      %46 = vector.extract %45[0, 0, 0] : f32 from vector<1x1x1xf32>
      %47 = vector.broadcast %34 : f32 to vector<8x128xf32>
      %48 = arith.subf %13, %47 : vector<8x128xf32>
      %49 = vector.broadcast %40 : f32 to vector<8x128xf32>
      %50 = arith.subf %15, %49 : vector<8x128xf32>
      %51 = vector.broadcast %46 : f32 to vector<8x128xf32>
      %52 = arith.subf %17, %51 : vector<8x128xf32>
      %53 = arith.mulf %48, %48 : vector<8x128xf32>
      %54 = arith.mulf %50, %50 : vector<8x128xf32>
      %55 = arith.addf %53, %54 : vector<8x128xf32>
      %56 = arith.mulf %52, %52 : vector<8x128xf32>
      %57 = arith.addf %55, %56 : vector<8x128xf32>
      %c0_20 = arith.constant 0 : index
      %c0_21 = arith.constant 0 : index
      %58 = vector.load %arg3[%c0_20, %c0_21] : memref<8x128xf32, #tpu.memory_space<vmem>>, vector<8x128xf32>
      %59 = arith.minimumf %58, %57 : vector<8x128xf32>
      %c0_22 = arith.constant 0 : index
      %c0_23 = arith.constant 0 : index
      %60 = vector.load %arg3[%c0_22, %c0_23] : memref<8x128xf32, #tpu.memory_space<vmem>>, vector<8x128xf32>
      tpu.vector_store %arg3[%c0_22, %c0_23], %59 {strides = array<i32>} : memref<8x128xf32, #tpu.memory_space<vmem>>, vector<8x128xf32>,
      %61 = vector.shape_cast %59 : vector<8x128xf32> to vector<1x8x128xf32>
      %cst_24 = arith.constant dense<0xFF800000> : vector<1xf32>
      %62 = vector.multi_reduction <maximumf>, %61, %cst_24 [1, 2] : vector<1x8x128xf32> to vector<1xf32>
      %63 = vector.shape_cast %62 : vector<1xf32> to vector<1x1x1xf32>
      %64 = vector.extract %63[0, 0, 0] : f32 from vector<1x1x1xf32>
      %65 = vector.broadcast %64 : f32 to vector<8x128xf32>
      %66 = arith.cmpf oeq, %59, %65 : vector<8x128xf32>
      %c1024_i32 = arith.constant 1024 : i32
      %67 = vector.broadcast %c1024_i32 : i32 to vector<8x128xi32>
      %68 = arith.select %66, %4, %67 : vector<8x128xi1>, vector<8x128xi32>
      %69 = vector.shape_cast %68 : vector<8x128xi32> to vector<1x8x128xi32>
      %cst_25 = arith.constant dense<2147483647> : vector<1xi32>
      %70 = vector.multi_reduction <minsi>, %69, %cst_25 [1, 2] : vector<1x8x128xi32> to vector<1xi32>
      %71 = vector.shape_cast %70 : vector<1xi32> to vector<1x1x1xi32>
      %72 = vector.extract %71[0, 0, 0] : i32 from vector<1x1x1xi32>
      scf.yield %72, %26 : i32, vector<1x128xi32>
    }
    %c16_i32_11 = arith.constant 16 : i32
    %c0_12 = arith.constant 0 : index
    %c0_13 = arith.constant 0 : index
    %22 = vector.load %arg2[%c0_12, %c0_13] : memref<1x128xi32, #tpu.memory_space<vmem>>, vector<1x128xi32>
    tpu.vector_store %arg2[%c0_12, %c0_13], %21#1 {strides = array<i32>} : memref<1x128xi32, #tpu.memory_space<vmem>>, vector<1x128xi32>,
    return
  }
}

</mosaic_0001>

<llo_original>
// kernel: tpu_custom_call.1
$region0: #{tpu_custom_call.1}
  #allocation0 [shape = 'u32[]', space=smem, size = 0x4, offset = 0x4, fixed_abs, tag = 'smem constant byte address 0x4 - core index']
  #allocation1 [shape = 'u32[144,128]{1,0:T(1,128)}', space=vmem, size = 0x12000, scoped, tag = 'internal scratch']
  #allocation2 [shape = 'f32[8,128]{1,0:T(8,128)}', space=vmem, size = 0x1000, scoped, tag = 'scratch operand']
  #allocation3 [shape = 's32[1]{0:T(128)S(6)}', space=smem, size = 0x200, scoped, tag = 'scoped memory for tpu_custom_call.1']
  %s0 = inlined_call_operand.<no memory space> [shape: s32[1], index: 0, kind: input, shape index: {}]
  %s1 = inlined_call_operand.hbm [shape: f32[3,8,128], index: 1, kind: input, shape index: {}]
  %s2 = inlined_call_operand.hbm [shape: s32[1,128], index: 2, kind: output, shape index: {}]
  %s3 = sld [smem:[#allocation0]]
  $region29: #{tpu_custom_call.1} parent=0
    _
  %s5 = ssub.s32 1, %s3
  %s6 = scalar_select 0, %s5, %s3
  %7 = sst [smem:[#allocation3]] %s0
  $region1: #{tpu_custom_call.1} parent=0
    #allocation4 [shape = 'u8[12288]{0}', space=vmem, size = 0x3000, scoped, tag = 'input window, operand 1, single buffered']
    #allocation5 [shape = 's32[1]{0}', space=sflag, size = 0x4, scoped, tag = 'scoped memory for tpu_custom_call.1']
    #allocation6 [shape = 's32[1]{0}', space=sflag, size = 0x4, scoped, tag = 'scoped memory for tpu_custom_call.1']
    #allocation7 [shape = 'u8[512]{0}', space=vmem, size = 0x400, scoped, tag = 'output window, operand 0, single buffered']
    %8 = vsyncpa [#allocation5], 0
    %9 = vsyncpa [#allocation6], 0
    // Predicated region
    $region2: #{tpu_custom_call.1} parent=1 // pred_check
      _
    $region3: #{tpu_custom_call.1} parent=1 // pred_check_branch
      %11 = sbr.rel (0) target = $region5
    $region4: #{tpu_custom_call.1} parent=1 // pred_region
      _
    $region5: #{tpu_custom_call.1} parent=1 // pred_fallthru
      _
    // Predicated region
    $region6: #{tpu_custom_call.1} parent=1 // pred_check
      _
    $region7: #{tpu_custom_call.1} parent=1 // pred_check_branch
      %13 = sbr.rel (0) target = $region9
    $region8: #{tpu_custom_call.1} parent=1 // pred_region
      %s15 = ssub.s32 384, 384
      %16 = vsyncadd [#allocation5], %s15
      %s17 = sshll.u32 [#allocation4], 4
      %s18 = int_to_ptr.vmem [resolvable:$true] %s17
      %23 = dma.hbm_to_vmem [thread:$0]  %s1, 384, %s18, [#allocation5], 128, 128, 8
    $region9: #{tpu_custom_call.1} parent=1 // pred_fallthru
      _
    // Predicated region
    $region10: #{tpu_custom_call.1} parent=1 // pred_check
      _
    $region11: #{tpu_custom_call.1} parent=1 // pred_check_branch
      %25 = sbr.rel (0) target = $region13
    $region12: #{tpu_custom_call.1} parent=1 // pred_region
      %26 = dma.done [#allocation5], 384
    $region13: #{tpu_custom_call.1} parent=1 // pred_fallthru
      _
    %v27 = vlaneseq
    %v28 = vshrl.u32 %v27, 7
    %v29 = vlaneseq
    %v30 = vand.u32 %v29, 127
    %v31 = vmul.u32 %v28, 128
    %v32 = vadd.s32 %v31, %v30
    %vm33 = vcmp.lt.s32.totalorder %v32, 256
    %v34 = vsel %vm33, 1e+10, -1.0
    %35 = vst [vmem:[#allocation2] sm:$0xff] %v34
    %v36 = vld [vmem:[#allocation4] sm:$0xff]
    %s37 = scalar_lea.vmem [#allocation4], 8
    %v38 = vld [vmem:[%s37] sm:$0xff]
    %s39 = scalar_lea.vmem [#allocation4], 16
    %v40 = vld [vmem:[%s39] sm:$0xff]
    %s41 = sld [smem:[#allocation3]]
    loop: start=0, step=1, limit=16
    $region14: #{tpu_custom_call.1} parent=1 // loop_pre_header
      _
    $region15: #{tpu_custom_call.1} parent=1 // loop_header
      %s43 = sphi 0, %s47
      %p44 = scmp.ge.s32.totalorder %s43, 16
      %s48 = sphi %s41, %s134
      %v49 = vphi 0, %v53
    $region16: #{tpu_custom_call.1} parent=1 // loop_header_branch
      %46 = sbr.rel (%p44) target = $region20
    $region17: #{tpu_custom_call.1} parent=1 // loop_body
      %v50 = vstv %s43
      %vm51 = vcmp.eq.s32.totalorder %v30, %v50
      %v52 = vstv %s48
      %v53 = vsel %vm51, %v52, %v49
      %vm54 = vcmp.eq.s32.totalorder %v32, %v52
      %v55 = vsel %vm54, %v36, 0.0
      %56 = vadd.xlane.f32.xlu0 %v55
      %v57 = vpop.xlane.xlu0 %56
      %v58 = vrot.slane %v57, 4
      %v59 = vadd.f32 %v57, %v58
      %v60 = vrot.slane %v59, 2
      %v61 = vadd.f32 %v59, %v60
      %v62 = vrot.slane %v61, 1
      %v63 = vadd.f32 %v61, %v62
      %s64 = vtos %v63
      %v65 = vsel %vm54, %v38, 0.0
      %66 = vadd.xlane.f32.xlu0 %v65
      %v67 = vpop.xlane.xlu0 %66
      %v68 = vrot.slane %v67, 4
      %v69 = vadd.f32 %v67, %v68
      %v70 = vrot.slane %v69, 2
      %v71 = vadd.f32 %v69, %v70
      %v72 = vrot.slane %v71, 1
      %v73 = vadd.f32 %v71, %v72
      %s74 = vtos %v73
      %v75 = vsel %vm54, %v40, 0.0
      %76 = vadd.xlane.f32.xlu0 %v75
      %v77 = vpop.xlane.xlu0 %76
      %v78 = vrot.slane %v77, 4
      %v79 = vadd.f32 %v77, %v78
      %v80 = vrot.slane %v79, 2
      %v81 = vadd.f32 %v79, %v80
      %v82 = vrot.slane %v81, 1
      %v83 = vadd.f32 %v81, %v82
      %s84 = vtos %v83
      %v85 = vstv %s64
      %v86 = vsub.f32 %v36, %v85
      %v87 = vstv %s74
      %v88 = vsub.f32 %v38, %v87
      %v89 = vstv %s84
      %v90 = vsub.f32 %v40, %v89
      %v91 = vmul.f32 %v86, %v86
      %v92 = vmul.f32 %v88, %v88
      %v93 = vadd.f32 %v91, %v92
      %v94 = vmul.f32 %v90, %v90
      %v95 = vadd.f32 %v93, %v94
      %v96 = vld [vmem:[#allocation2] sm:$0xff]
      %v97 = vmin.f32 %v96, %v95
      %98 = vst [vmem:[#allocation2] sm:$0xff] %v97
      %99 = vmax.xlane.f32.xlu0 %v97
      %v100 = vpop.xlane.xlu0 %99
      %v101 = vrot.slane %v100, 4
      %v102 = vmax.f32 %v100, %v101
      %v103 = vrot.slane %v102, 2
      %v104 = vmax.f32 %v102, %v103
      %v105 = vrot.slane %v104, 1
      %v106 = vmax.f32 %v104, %v105
      %s107 = vtos %v106
      %v108 = vstv %s107
      %vm109 = vcmp.eq.f32.partialorder %v97, %v108
      %v110 = vsel %vm109, %v32, 1024
      %v111 = vand.u32 %v110, 65535
      %v112 = vshra.s32 %v110, 16
      %v113 = vcvt.s32.f32 %v111
      %v114 = vcvt.s32.f32 %v112
      %115 = vmin.xlane.f32.xlu0 %v114
      %v116 = vpop.xlane.xlu0 %115
      %vm117 = vcmp.eq.f32.partialorder %v114, %v116
      %v118 = vsel %vm117, %v113, inf
      %119 = vmin.xlane.f32.xlu0 %v118
      %v120 = vpop.xlane.xlu0 %119
      %v121 = vcvt.f32.s32 %v120
      %v122 = vcvt.f32.s32 %v116
      %v123 = vshll.u32 %v122, 16
      %v124 = vadd.s32 %v123, %v121
      %v125 = vrot.slane %v124, 4
      %vm126 = vcmp.lt.s32.totalorder %v124, %v125
      %v127 = vsel %vm126, %v124, %v125
      %v128 = vrot.slane %v127, 2
      %vm129 = vcmp.lt.s32.totalorder %v127, %v128
      %v130 = vsel %vm129, %v127, %v128
      %v131 = vrot.slane %v130, 1
      %vm132 = vcmp.lt.s32.totalorder %v130, %v131
      %v133 = vsel %vm132, %v130, %v131
      %s134 = vtos %v133
    $region18: #{tpu_custom_call.1} parent=1 // loop_footer
      %s47 = sadd.s32 1, %s43
    $region19: #{tpu_custom_call.1} parent=1 // loop_footer_branch
      %42 = sbr.rel target = $region15
    $region20: #{tpu_custom_call.1} parent=1 // loop_exit
      _
    %135 = vst [vmem:[#allocation7] sm:$0x1] %v49
    // Predicated region
    $region21: #{tpu_custom_call.1} parent=1 // pred_check
      _
    $region22: #{tpu_custom_call.1} parent=1 // pred_check_branch
      %137 = sbr.rel (0) target = $region24
    $region23: #{tpu_custom_call.1} parent=1 // pred_region
      %s139 = ssub.s32 16, 16
      %140 = vsyncadd [#allocation6], %s139
      %s142 = sshll.u32 [#allocation7], 4
      %s143 = int_to_ptr.vmem [resolvable:$true] %s142
      %145 = dma.vmem_to_hbm [thread:$0]  %s143, 16, %s2, [#allocation6]
    $region24: #{tpu_custom_call.1} parent=1 // pred_fallthru
      _
    // Predicated region
    $region25: #{tpu_custom_call.1} parent=1 // pred_check
      _
    $region26: #{tpu_custom_call.1} parent=1 // pred_check_branch
      %147 = sbr.rel (0) target = $region28
    $region27: #{tpu_custom_call.1} parent=1 // pred_region
      %148 = dma.done [#allocation6], 16
    $region28: #{tpu_custom_call.1} parent=1 // pred_fallthru
      _
    %149 = vsyncpa [#allocation5], 1
    %150 = vsyncpa [#allocation6], 1

</llo_original>
